<compile_context>
chip_gen: v5e
topology: v5e:2x2
jax: 0.10.0
libtpu: 0.0.40
codegen_flags: <defaults>
</compile_context>

<pallas_src>
import jax
import jax.numpy as jnp
from jax.experimental import pallas as pl
from jax.experimental.pallas import tpu as pltpu

WORLD_SIZE = 1   # single-device emulation of dist.get_world_size()
LANE = 128       # TPU vreg lane width
SUBLANE = 8      # TPU vreg sublane count (f32)


def _round_up(n, m):
    return ((n + m - 1) // m) * m


# ----------------------------------------------------------------------------
# Pallas kernel: linear layer forward (the wrapped module's hot path)
# ----------------------------------------------------------------------------
def _linear_kernel(x_ref, w_ref, b_ref, o_ref):
    # x_ref: [TM, IN_P], w_ref: [IN_P, OUT_P], b_ref: [1, OUT_P], o_ref: [TM, OUT_P]
    acc = jnp.dot(x_ref[...], w_ref[...], preferred_element_type=jnp.float32)
    # Epilogue stays in f32 (v5e has no bf16 VPU path); single cast at store.
    o_ref[...] = (acc + b_ref[...]).astype(o_ref.dtype)


def linear_forward_padded(x_pad, w_io_pad, bias_pad, *, tm):
    """Padded, lane-dense linear forward. All shapes already (8,128)-aligned."""
    B_P, IN_P = x_pad.shape
    OUT_P = w_io_pad.shape[1]
    nb = B_P // tm

    # VMEM budget: double-buffered x/out tiles + resident weight/bias (+slack),
    # clamped to stay well under the 64-MiB v7x physical VMEM.
    itemsize = jnp.dtype(x_pad.dtype).itemsize
    vmem_est = (2 * tm * IN_P * itemsize          # x tile, double buffered
                + IN_P * OUT_P * itemsize         # weight (resident)
                + OUT_P * 4                       # bias
                + 2 * tm * OUT_P * 4)             # out tile, double buffered
    vmem_limit = int(min(max(2 * vmem_est, 16 << 20), 48 << 20))

    return pl.pallas_call(
        _linear_kernel,
        out_shape=jax.ShapeDtypeStruct((B_P, OUT_P), jnp.float32),
        grid=(nb,),
        in_specs=[
            pl.BlockSpec((tm, IN_P), lambda i: (i, 0)),
            pl.BlockSpec((IN_P, OUT_P), lambda i: (0, 0)),
            pl.BlockSpec((1, OUT_P), lambda i: (0, 0)),
        ],
        out_specs=pl.BlockSpec((tm, OUT_P), lambda i: (i, 0)),
        compiler_params=pltpu.CompilerParams(
            dimension_semantics=("parallel",),  # batch shards across v7x's 2 TCs
            vmem_limit_bytes=vmem_limit,
        ),
    )(x_pad, w_io_pad, bias_pad)


# ----------------------------------------------------------------------------
# flat_dist_call emulation (glue, plain JAX): flatten -> broadcast -> /world
# ----------------------------------------------------------------------------
def flat_dist_call_broadcast(params):
    """Emulates _flatten_dense_tensors + dist.broadcast(src=0) + /= world_size
    + _unflatten_dense_tensors + copy_ back, for a single-process world.
    NOTE: apex's flat_dist_call really does divide the broadcast *parameters*
    by world size in __init__; identity here because WORLD_SIZE == 1."""
    shapes = [p.shape for p in params]
    sizes = [p.size for p in params]
    coalesced = jnp.concatenate([p.reshape(-1) for p in params])
    # dist.broadcast(coalesced, 0): on rank 0 / world_size 1 this is identity.
    coalesced = coalesced / WORLD_SIZE
    out, off = [], 0
    for shp, sz in zip(shapes, sizes):
        out.append(coalesced[off:off + sz].reshape(shp))
        off += sz
    return out


# ----------------------------------------------------------------------------
# DistributedDataParallel wrapper
# ----------------------------------------------------------------------------
class DistributedDataParallelPallas:
    def __init__(self, weight_oi, bias, *, matmul_dtype=jnp.float32, tm=512):
        # __init__-time parameter sync (broadcast + divide by world size).
        weight_oi, bias = flat_dist_call_broadcast([weight_oi, bias])
        self.weight_oi = weight_oi            # PyTorch layout [OUT, IN]
        self.bias = bias
        self.out_features, self.in_features = weight_oi.shape
        self.matmul_dtype = matmul_dtype
        self.tm = tm

        # Hoist the per-call weight transpose + lane padding out of forward:
        # the [IN_P, OUT_P] matmul operand is computed once here.
        in_p = _round_up(self.in_features, LANE)
        out_p = _round_up(self.out_features, LANE)
        w_io = weight_oi.T.astype(matmul_dtype)            # [IN, OUT]
        self.w_io_pad = (
            jnp.zeros((in_p, out_p), matmul_dtype)
            .at[: self.in_features, : self.out_features].set(w_io)
        )
        # Bias kept in f32 for the f32 epilogue.
        self.bias_pad = (
            jnp.zeros((1, out_p), jnp.float32)
            .at[0, : self.out_features].set(bias.astype(jnp.float32))
        )
        self.in_p, self.out_p = in_p, out_p
        self.needs_reduction = False
        # TODO(synk): backward gradient-bucket all-reduce (ring reduce-scatter /
        # all-gather via pltpu.make_async_remote_copy + collective_id) is a
        # backward-pass hook with no forward-pass equivalent; not modeled here.

    def __call__(self, x):
        self.needs_reduction = True
        B = x.shape[0]
        tm = self.tm if B >= self.tm else _round_up(B, SUBLANE)
        b_p = _round_up(B, tm)
        x_pad = (
            jnp.zeros((b_p, self.in_p), self.matmul_dtype)
            .at[:B, : self.in_features].set(x.astype(self.matmul_dtype))
        )
        out_pad = linear_forward_padded(x_pad, self.w_io_pad, self.bias_pad, tm=tm)
        return out_pad[:B, : self.out_features].astype(x.dtype)


if __name__ == "__main__":
    B, IN, OUT = 8, 32, 32
    key = jax.random.PRNGKey(0)
    kx, kw, kb = jax.random.split(key, 3)

    # PyTorch nn.Linear default init: U(-1/sqrt(in), 1/sqrt(in))
    bound = 1.0 / (IN ** 0.5)
    weight_oi = jax.random.uniform(kw, (OUT, IN), jnp.float32, -bound, bound)
    bias = jax.random.uniform(kb, (OUT,), jnp.float32, -bound, bound)
    x = jax.random.normal(kx, (B, IN), jnp.float32)

    ddp = DistributedDataParallelPallas(weight_oi, bias)
    out = jax.block_until_ready(ddp(x))

    # Sanity check against plain-JAX reference (params already synced).
    ref = x @ ddp.weight_oi.T + ddp.bias
    assert out.shape == (B, OUT), f"bad output shape {out.shape}"
    assert bool(jnp.allclose(out, ref, atol=1e-5)), "mismatch vs reference"

    print("KERNEL_OK")
</pallas_src>

<mosaic_0001>
module attributes {stable_mosaic.version = 11 : i64} {
  func.func @_linear_kernel(%arg0: i32, %arg1: memref<8x128xf32, #tpu.memory_space<vmem>>, %arg2: memref<128x128xf32, #tpu.memory_space<vmem>>, %arg3: memref<1x128xf32, #tpu.memory_space<vmem>>, %arg4: memref<8x128xf32, #tpu.memory_space<vmem>>) attributes {dimension_semantics = [#tpu.dimension_semantics<parallel>], iteration_bounds = array<i64: 1>, scalar_prefetch = 0 : i64, scratch_operands = 0 : i64, tpu.core_type = #tpu.core_type<tc>, window_params = [{transform_indices = @transform_0, window_bounds = array<i64: 8, 128>}, {pipeline_mode = #tpu.pipeline_mode<synchronous>, transform_indices = @transform_1, window_bounds = array<i64: 128, 128>}, {pipeline_mode = #tpu.pipeline_mode<synchronous>, transform_indices = @transform_2, window_bounds = array<i64: 1, 128>}, {transform_indices = @transform_3, window_bounds = array<i64: 8, 128>}]} {
    %c0 = arith.constant 0 : index
    %c0_0 = arith.constant 0 : index
    %0 = vector.load %arg1[%c0, %c0_0] : memref<8x128xf32, #tpu.memory_space<vmem>>, vector<8x128xf32>
    %c0_1 = arith.constant 0 : index
    %c0_2 = arith.constant 0 : index
    %1 = vector.load %arg2[%c0_1, %c0_2] : memref<128x128xf32, #tpu.memory_space<vmem>>, vector<128x128xf32>
    %cst = arith.constant dense<0.000000e+00> : vector<8x128xf32>
    %2 = tpu.matmul %0, %1, %cst {dimension_numbers = #tpu.dot_dimension_numbers<[1], [0], [0], [1], [0, 0, 1, 1], [], []>} : vector<8x128xf32>, vector<128x128xf32>, vector<8x128xf32> -> vector<8x128xf32>
    %c0_3 = arith.constant 0 : index
    %c0_4 = arith.constant 0 : index
    %3 = vector.load %arg3[%c0_3, %c0_4] : memref<1x128xf32, #tpu.memory_space<vmem>>, vector<1x128xf32>
    %4 = vector.broadcast %3 : vector<1x128xf32> to vector<8x128xf32>
    %5 = arith.addf %2, %4 : vector<8x128xf32>
    %c0_5 = arith.constant 0 : index
    %c0_6 = arith.constant 0 : index
    %6 = vector.load %arg4[%c0_5, %c0_6] : memref<8x128xf32, #tpu.memory_space<vmem>>, vector<8x128xf32>
    tpu.vector_store %arg4[%c0_5, %c0_6], %5 {strides = array<i32>} : memref<8x128xf32, #tpu.memory_space<vmem>>, vector<8x128xf32>,
    return
  }
  func.func @transform_0(%arg0: i32) -> (i32, i32) {
    %c0_i32 = arith.constant 0 : i32
    %c0_i32_0 = arith.constant 0 : i32
    return %arg0, %c0_i32 : i32, i32
  }
  func.func @transform_1(%arg0: i32) -> (i32, i32) {
    %c0_i32 = arith.constant 0 : i32
    %c0_i32_0 = arith.constant 0 : i32
    %c0_i32_1 = arith.constant 0 : i32
    return %c0_i32, %c0_i32_0 : i32, i32
  }
  func.func @transform_2(%arg0: i32) -> (i32, i32) {
    %c0_i32 = arith.constant 0 : i32
    %c0_i32_0 = arith.constant 0 : i32
    %c0_i32_1 = arith.constant 0 : i32
    return %c0_i32, %c0_i32_0 : i32, i32
  }
  func.func @transform_3(%arg0: i32) -> (i32, i32) {
    %c0_i32 = arith.constant 0 : i32
    %c0_i32_0 = arith.constant 0 : i32
    return %arg0, %c0_i32 : i32, i32
  }
}

</mosaic_0001>

<llo_original>
// kernel: tpu_custom_call.1
$region0: #{tpu_custom_call.1}
  #allocation0 [shape = 'u32[]', space=smem, size = 0x4, offset = 0x4, fixed_abs, tag = 'smem constant byte address 0x4 - core index']
  #allocation1 [shape = 'u32[72,128]{1,0:T(1,128)}', space=vmem, size = 0x9000, scoped, tag = 'internal scratch']
  %s0 = inlined_call_operand.hbm [shape: f32[8,128], index: 0, kind: input, shape index: {}]
  %s1 = inlined_call_operand.hbm [shape: f32[128,128], index: 1, kind: input, shape index: {}]
  %s2 = inlined_call_operand.vmem [shape: f32[1,128], index: 2, kind: input, shape index: {}]
  %s3 = inlined_call_operand.hbm [shape: f32[8,128], index: 3, kind: output, shape index: {}]
  %s4 = sld [smem:[#allocation0]]
  $region30: #{tpu_custom_call.1} parent=0
    _
  %s6 = ssub.s32 1, %s4
  %s7 = scalar_select 0, %s6, %s4
  $region1: #{tpu_custom_call.1} parent=0
    #allocation2 [shape = 'u8[4096]{0}', space=vmem, size = 0x1000, scoped, tag = 'input window, operand 0, single buffered']
    #allocation3 [shape = 's32[1]{0}', space=sflag, size = 0x4, scoped, tag = 'scoped memory for tpu_custom_call.1']
    #allocation4 [shape = 's32[1]{0}', space=sflag, size = 0x4, scoped, tag = 'scoped memory for tpu_custom_call.1']
    #allocation5 [shape = 'u8[65536]{0}', space=vmem, size = 0x10000, scoped, tag = 'input window, operand 1, single buffered']
    #allocation6 [shape = 's32[1]{0}', space=sflag, size = 0x4, scoped, tag = 'scoped memory for tpu_custom_call.1']
    #allocation7 [shape = 'u8[4096]{0}', space=vmem, size = 0x1000, scoped, tag = 'output window, operand 0, single buffered']
    %8 = vsyncpa [#allocation3], 0
    %9 = vsyncpa [#allocation6], 0
    %10 = vsyncpa [#allocation4], 0
    // Predicated region
    $region2: #{tpu_custom_call.1} parent=1 // pred_check
      _
    $region3: #{tpu_custom_call.1} parent=1 // pred_check_branch
      %12 = sbr.rel (0) target = $region5
    $region4: #{tpu_custom_call.1} parent=1 // pred_region
      %14 = vsyncadd [#allocation3], 0
      %s16 = sshll.u32 %s0, 4
      %s17 = int_to_ptr.hbm [resolvable:$true] %s16
      %s18 = sshll.u32 [#allocation2], 4
      %s19 = int_to_ptr.vmem [resolvable:$true] %s18
      %21 = dma.hbm_to_vmem [thread:$0]  %s17, 128, %s19, [#allocation3]
    $region5: #{tpu_custom_call.1} parent=1 // pred_fallthru
      _
    // Predicated region
    $region6: #{tpu_custom_call.1} parent=1 // pred_check
      _
    $region7: #{tpu_custom_call.1} parent=1 // pred_check_branch
      %23 = sbr.rel (0) target = $region9
    $region8: #{tpu_custom_call.1} parent=1 // pred_region
      %25 = vsyncadd [#allocation6], 0
      %s26 = sshll.u32 %s1, 4
      %s27 = int_to_ptr.hbm [resolvable:$true] %s26
      %s28 = sshll.u32 [#allocation5], 4
      %s29 = int_to_ptr.vmem [resolvable:$true] %s28
      %34 = dma.hbm_to_vmem [thread:$0]  %s27, 2048, %s29, [#allocation6], 128, 128, 8
    $region9: #{tpu_custom_call.1} parent=1 // pred_fallthru
      _
    // Predicated region
    $region10: #{tpu_custom_call.1} parent=1 // pred_check
      _
    $region11: #{tpu_custom_call.1} parent=1 // pred_check_branch
      %36 = sbr.rel (0) target = $region13
    $region12: #{tpu_custom_call.1} parent=1 // pred_region
      _
    $region13: #{tpu_custom_call.1} parent=1 // pred_fallthru
      _
    // Predicated region
    $region14: #{tpu_custom_call.1} parent=1 // pred_check
      _
    $region15: #{tpu_custom_call.1} parent=1 // pred_check_branch
      %38 = sbr.rel (0) target = $region17
    $region16: #{tpu_custom_call.1} parent=1 // pred_region
      %40 = dma.done [#allocation3], 128
    $region17: #{tpu_custom_call.1} parent=1 // pred_fallthru
      _
    // Predicated region
    $region18: #{tpu_custom_call.1} parent=1 // pred_check
      _
    $region19: #{tpu_custom_call.1} parent=1 // pred_check_branch
      %42 = sbr.rel (0) target = $region21
    $region20: #{tpu_custom_call.1} parent=1 // pred_region
      %44 = dma.done [#allocation6], 2048
    $region21: #{tpu_custom_call.1} parent=1 // pred_fallthru
      _
    %v45 = vld [vmem:[#allocation2] sm:$0xff]
    %v46 = vld [vmem:[#allocation5] sm:$0xff]
    %v47 = vld [vmem:[#allocation5 + $0x8] sm:$0xff]
    %v48 = vld [vmem:[#allocation5 + $0x10] sm:$0xff]
    %v49 = vld [vmem:[#allocation5 + $0x18] sm:$0xff]
    %v50 = vld [vmem:[#allocation5 + $0x20] sm:$0xff]
    %v51 = vld [vmem:[#allocation5 + $0x28] sm:$0xff]
    %v52 = vld [vmem:[#allocation5 + $0x30] sm:$0xff]
    %v53 = vld [vmem:[#allocation5 + $0x38] sm:$0xff]
    %v54 = vld [vmem:[#allocation5 + $0x40] sm:$0xff]
    %v55 = vld [vmem:[#allocation5 + $0x48] sm:$0xff]
    %v56 = vld [vmem:[#allocation5 + $0x50] sm:$0xff]
    %v57 = vld [vmem:[#allocation5 + $0x58] sm:$0xff]
    %v58 = vld [vmem:[#allocation5 + $0x60] sm:$0xff]
    %v59 = vld [vmem:[#allocation5 + $0x68] sm:$0xff]
    %v60 = vld [vmem:[#allocation5 + $0x70] sm:$0xff]
    %v61 = vld [vmem:[#allocation5 + $0x78] sm:$0xff]
    %v62 = vld [vmem:[%s2] sm:$0x1]
    %v64 = vperm.slane %v62, 0
    %66 = vmatpush.msra.mxu0 %v61
    %67 = vmatpush.msra.mxu0 %v60
    %68 = vmatpush.msra.mxu0 %v59
    %69 = vmatpush.msra.mxu0 %v58
    %70 = vmatpush.msra.mxu0 %v57
    %71 = vmatpush.msra.mxu0 %v56
    %72 = vmatpush.msra.mxu0 %v55
    %73 = vmatpush.msra.mxu0 %v54
    %74 = vmatpush.msra.mxu0 %v53
    %75 = vmatpush.msra.mxu0 %v52
    %76 = vmatpush.msra.mxu0 %v51
    %77 = vmatpush.msra.mxu0 %v50
    %78 = vmatpush.msra.mxu0 %v49
    %79 = vmatpush.msra.mxu0 %v48
    %80 = vmatpush.msra.mxu0 %v47
    %81 = vmatpush.msra.mxu0 %v46
    %82 = vmatmul.f32.gmra.mxu0 %v45
    %v83 = vpop.f32.mrf.mxu0
    %v84 = vadd.f32 %v64, %v83
    %85 = vdwg.mxu0
    %86 = vst [vmem:[#allocation7] sm:$0xff] %v84
    // Predicated region
    $region22: #{tpu_custom_call.1} parent=1 // pred_check
      _
    $region23: #{tpu_custom_call.1} parent=1 // pred_check_branch
      %88 = sbr.rel (0) target = $region25
    $region24: #{tpu_custom_call.1} parent=1 // pred_region
      %90 = vsyncadd [#allocation4], 0
      %s92 = sshll.u32 [#allocation7], 4
      %s93 = int_to_ptr.vmem [resolvable:$true] %s92
      %s94 = sshll.u32 %s3, 4
      %s95 = int_to_ptr.hbm [resolvable:$true] %s94
      %97 = dma.vmem_to_hbm [thread:$0]  %s93, 128, %s95, [#allocation4]
    $region25: #{tpu_custom_call.1} parent=1 // pred_fallthru
      _
    // Predicated region
    $region26: #{tpu_custom_call.1} parent=1 // pred_check
      _
    $region27: #{tpu_custom_call.1} parent=1 // pred_check_branch
      %99 = sbr.rel (0) target = $region29
    $region28: #{tpu_custom_call.1} parent=1 // pred_region
      %101 = dma.done [#allocation4], 128
    $region29: #{tpu_custom_call.1} parent=1 // pred_fallthru
      _
    %102 = vsyncpa [#allocation3], 1
    %103 = vsyncpa [#allocation6], 1
    %104 = vsyncpa [#allocation4], 1

</llo_original>
